<compile_context>
chip_gen: v5e
topology: v5e:2x2
jax: 0.10.0
libtpu: 0.0.40
codegen_flags: <defaults>
</compile_context>

<pallas_src>
import functools
import math

import jax
import jax.numpy as jnp
from jax.experimental import pallas as pl
from jax.experimental.pallas import tpu as pltpu


def _pe_sincos_kernel(pos_ref, inv_freq_ref, out_ref, *, padding_idx, out_dim):
    # pos_ref     : (1, TS, 1)     int32   positions for this (batch, seq-tile)
    # inv_freq_ref: (1, half_dim)  float32 per-frequency scales
    # out_ref     : (1, TS, D)     out_dtype
    pos = pos_ref[0]                               # (TS, 1) int32, sublane-major
    posf = pos.astype(jnp.float32)                 # (TS, 1)

    # Outer product via broadcasting: (TS,1) * (1,half) -> (TS, half).  VPU.
    ang = posf * inv_freq_ref[...]                 # (TS, half_dim)

    # Transcendentals on the EUP slot (hidden under the HBM writeback).
    parts = [jnp.sin(ang), jnp.cos(ang)]
    if out_dim % 2 == 1:                           # trailing zero column
        parts.append(jnp.zeros((pos.shape[0], 1), jnp.float32))
    emb = jnp.concatenate(parts, axis=-1)          # (TS, D)

    # Padding tokens (position == padding_idx) get an all-zero embedding,
    # exactly like the zeroed padding row of the fairseq table.
    emb = jnp.where(pos != padding_idx, emb, 0.0)

    # Single lane-dense, full-D store per grid step.
    out_ref[0] = emb.astype(out_ref.dtype)


def _round_up(x: int, m: int) -> int:
    return ((x + m - 1) // m) * m


def _choose_tiling(seq: int, emb_dim: int, bsz: int):
    """Return (padded_seq, seq_tile)."""
    # Keep each (TS, D) f32 temporary under ~2 MiB so elementwise temps +
    # the double-buffered output block stay well within scoped VMEM on v5e.
    budget_elems = (2 << 20) // 4
    ts = 128
    for cand in (1024, 512, 256, 128):
        if cand * max(emb_dim, 1) <= budget_elems:
            ts = cand
            break

    if seq <= 128:
        seq_p = _round_up(max(seq, 8), 8)
        ts = seq_p
        # v7x has 2 TensorCores: keep >=2 grid steps even for bsz==1.
        if bsz == 1 and seq_p >= 16 and seq_p % 16 == 0:
            ts = seq_p // 2
        return seq_p, ts

    # Keep at least 2 seq tiles so the output writeback stays double-buffered.
    while ts > 128 and seq <= ts:
        ts //= 2
    seq_p = _round_up(seq, ts)
    return seq_p, ts


def sinusoidal_positional_embedding(ids, embedding_dim: int, padding_idx: int,
                                    out_dtype=jnp.float32):
    """ids: int [bsz, seq]. Returns out_dtype [bsz, seq, embedding_dim]."""
    ids = ids.astype(jnp.int32)
    bsz, seq = ids.shape
    half_dim = embedding_dim // 2

    # --- make_positions (wrapper-side; keeps both grid axes parallel) -------
    mask = (ids != padding_idx).astype(jnp.int32)
    positions = jnp.cumsum(mask, axis=1) * mask + padding_idx        # [B, S]

    # --- pad seq so every tile is full and the pipeline stays engaged ------
    seq_p, ts = _choose_tiling(seq, embedding_dim, bsz)
    if seq_p != seq:
        positions = jnp.pad(positions, ((0, 0), (0, seq_p - seq)),
                            constant_values=padding_idx)
    positions = positions.reshape(bsz, seq_p, 1)                      # sublane-major

    # --- tiny per-frequency scale vector (the only other kernel input) -----
    emb_scale = math.log(10000.0) / max(half_dim - 1, 1)   # guard embedding_dim == 2
    inv_freq = jnp.exp(jnp.arange(half_dim, dtype=jnp.float32) * (-emb_scale))
    inv_freq = inv_freq.reshape(1, half_dim)

    grid = (bsz, seq_p // ts)

    # Generous but safe scoped-VMEM budget: double-buffered out block plus a
    # handful of f32 temporaries; clamped well below v7x's 64 MiB physical.
    tile_bytes = ts * embedding_dim * 4
    vmem_limit = int(min(max(8 * tile_bytes + (1 << 20), 24 << 20), 48 << 20))

    kernel = functools.partial(_pe_sincos_kernel,
                               padding_idx=padding_idx,
                               out_dim=embedding_dim)

    out = pl.pallas_call(
        kernel,
        out_shape=jax.ShapeDtypeStruct((bsz, seq_p, embedding_dim), out_dtype),
        grid=grid,
        in_specs=[
            pl.BlockSpec((1, ts, 1), lambda b, s: (b, s, 0)),
            pl.BlockSpec((1, half_dim), lambda b, s: (0, 0)),
        ],
        out_specs=pl.BlockSpec((1, ts, embedding_dim), lambda b, s: (b, s, 0)),
        compiler_params=pltpu.CompilerParams(
            dimension_semantics=("parallel", "parallel"),
            vmem_limit_bytes=vmem_limit),
    )(positions, inv_freq)

    if seq_p != seq:
        out = out[:, :seq, :]
    return out


def _reference(ids, embedding_dim, padding_idx):
    """Plain-JAX reference matching the PyTorch forward."""
    bsz, seq = ids.shape
    half_dim = embedding_dim // 2
    emb_scale = math.log(10000.0) / max(half_dim - 1, 1)
    inv_freq = jnp.exp(jnp.arange(half_dim, dtype=jnp.float32) * (-emb_scale))

    mask = (ids != padding_idx).astype(jnp.int32)
    positions = jnp.cumsum(mask, axis=1) * mask + padding_idx         # [B, S]

    max_pos = padding_idx + 1 + seq
    pos_range = jnp.arange(max_pos, dtype=jnp.float32)
    ang = pos_range[:, None] * inv_freq[None, :]
    table = jnp.concatenate([jnp.sin(ang), jnp.cos(ang)], axis=1)
    if embedding_dim % 2 == 1:
        table = jnp.concatenate(
            [table, jnp.zeros((max_pos, 1), jnp.float32)], axis=1)
    table = table.at[padding_idx, :].set(0.0)
    return table[positions]                                           # [B, S, D]


if __name__ == "__main__":
    # config 1: even embedding dim
    bsz, seq, embedding_dim, padding_idx = 2, 8, 32, 1
    ids = jax.random.randint(jax.random.PRNGKey(0), (bsz, seq), 0, 10,
                             dtype=jnp.int32)
    out = jax.block_until_ready(
        sinusoidal_positional_embedding(ids, embedding_dim, padding_idx))
    ref = _reference(ids, embedding_dim, padding_idx)
    assert out.shape == (bsz, seq, embedding_dim)
    assert jnp.allclose(out, ref, atol=1e-5, rtol=1e-5), "mismatch (even D)"

    # config 2: odd embedding dim (trailing zero column), different padding_idx
    bsz2, seq2, dim2, pad2 = 2, 8, 33, 0
    ids2 = jax.random.randint(jax.random.PRNGKey(1), (bsz2, seq2), 0, 6,
                              dtype=jnp.int32)
    out2 = jax.block_until_ready(
        sinusoidal_positional_embedding(ids2, dim2, pad2))
    ref2 = _reference(ids2, dim2, pad2)
    assert out2.shape == (bsz2, seq2, dim2)
    assert jnp.allclose(out2, ref2, atol=1e-5, rtol=1e-5), "mismatch (odd D)"

    # config 3: irregular seq (exercises the wrapper-side padding path)
    bsz3, seq3, dim3, pad3 = 1, 20, 32, 1
    ids3 = jax.random.randint(jax.random.PRNGKey(2), (bsz3, seq3), 0, 10,
                              dtype=jnp.int32)
    out3 = jax.block_until_ready(
        sinusoidal_positional_embedding(ids3, dim3, pad3))
    ref3 = _reference(ids3, dim3, pad3)
    assert out3.shape == (bsz3, seq3, dim3)
    assert jnp.allclose(out3, ref3, atol=1e-5, rtol=1e-5), "mismatch (padded seq)"

    print("KERNEL_OK")
</pallas_src>

<mosaic_0001>
module attributes {stable_mosaic.version = 11 : i64} {
  func.func @_pe_sincos_kernel(%arg0: i32, %arg1: i32, %arg2: memref<1x8x1xi32, #tpu.memory_space<vmem>>, %arg3: memref<1x16xf32, #tpu.memory_space<vmem>>, %arg4: memref<1x8x32xf32, #tpu.memory_space<vmem>>) attributes {dimension_semantics = [#tpu.dimension_semantics<parallel>, #tpu.dimension_semantics<parallel>], iteration_bounds = array<i64: 2, 1>, scalar_prefetch = 0 : i64, scratch_operands = 0 : i64, tpu.core_type = #tpu.core_type<tc>, window_params = [{transform_indices = @transform_0, window_bounds = array<i64: 1, 8, 1>}, {pipeline_mode = #tpu.pipeline_mode<synchronous>, transform_indices = @transform_1, window_bounds = array<i64: 1, 16>}, {transform_indices = @transform_2, window_bounds = array<i64: 1, 8, 32>}]} {
    %c0 = arith.constant 0 : index
    %c0_0 = arith.constant 0 : index
    %c0_1 = arith.constant 0 : index
    %0 = vector.load %arg2[%c0, %c0_0, %c0_1] : memref<1x8x1xi32, #tpu.memory_space<vmem>>, vector<1x8x1xi32>
    %1 = vector.shape_cast %0 : vector<1x8x1xi32> to vector<8x1xi32>
    %2 = arith.sitofp %1 : vector<8x1xi32> to vector<8x1xf32>
    %c0_2 = arith.constant 0 : index
    %c0_3 = arith.constant 0 : index
    %3 = vector.load %arg3[%c0_2, %c0_3] : memref<1x16xf32, #tpu.memory_space<vmem>>, vector<1x16xf32>
    %4 = vector.broadcast %2 : vector<8x1xf32> to vector<8x16xf32>
    %5 = vector.broadcast %3 : vector<1x16xf32> to vector<8x16xf32>
    %6 = arith.mulf %4, %5 : vector<8x16xf32>
    %7 = math.sin %6 : vector<8x16xf32>
    %8 = math.cos %6 : vector<8x16xf32>
    %9 = tpu.concatenate %7, %8 in 1 : vector<8x16xf32>, vector<8x16xf32> -> vector<8x32xf32>
    %c1_i32 = arith.constant 1 : i32
    %10 = vector.broadcast %c1_i32 : i32 to vector<8x1xi32>
    %11 = arith.cmpi ne, %1, %10 : vector<8x1xi32>
    %cst = arith.constant 0.000000e+00 : f32
    %12 = vector.shape_cast %11 : vector<8x1xi1> to vector<8x1xi1>
    %13 = vector.broadcast %12 : vector<8x1xi1> to vector<8x32xi1>
    %14 = vector.broadcast %cst : f32 to vector<8x32xf32>
    %15 = arith.select %13, %9, %14 : vector<8x32xi1>, vector<8x32xf32>
    %c0_4 = arith.constant 0 : index
    %c0_5 = arith.constant 0 : index
    %c0_6 = arith.constant 0 : index
    %16 = vector.load %arg4[%c0_4, %c0_5, %c0_6] : memref<1x8x32xf32, #tpu.memory_space<vmem>>, vector<1x8x32xf32>
    %17 = vector.shape_cast %16 : vector<1x8x32xf32> to vector<8x32xf32>
    %18 = vector.shape_cast %15 : vector<8x32xf32> to vector<1x8x32xf32>
    tpu.vector_store %arg4[%c0_4, %c0_5, %c0_6], %18 {strides = array<i32>} : memref<1x8x32xf32, #tpu.memory_space<vmem>>, vector<1x8x32xf32>,
    return
  }
  func.func @transform_0(%arg0: i32, %arg1: i32) -> (i32, i32, i32) {
    %c0_i32 = arith.constant 0 : i32
    %c0_i32_0 = arith.constant 0 : i32
    return %arg0, %arg1, %c0_i32 : i32, i32, i32
  }
  func.func @transform_1(%arg0: i32, %arg1: i32) -> (i32, i32) {
    %c0_i32 = arith.constant 0 : i32
    %c0_i32_0 = arith.constant 0 : i32
    %c0_i32_1 = arith.constant 0 : i32
    return %c0_i32, %c0_i32_0 : i32, i32
  }
  func.func @transform_2(%arg0: i32, %arg1: i32) -> (i32, i32, i32) {
    %c0_i32 = arith.constant 0 : i32
    %c0_i32_0 = arith.constant 0 : i32
    return %arg0, %arg1, %c0_i32 : i32, i32, i32
  }
}

</mosaic_0001>

<llo_original>
// kernel: tpu_custom_call.1
$region0: #{tpu_custom_call.1}
  #allocation0 [shape = 'u32[]', space=smem, size = 0x4, offset = 0x4, fixed_abs, tag = 'smem constant byte address 0x4 - core index']
  #allocation1 [shape = 'u32[72,128]{1,0:T(1,128)}', space=vmem, size = 0x9000, scoped, tag = 'internal scratch']
  %s0 = inlined_call_operand.vmem [shape: s32[2,8,1], index: 0, kind: input, shape index: {}]
  %s1 = inlined_call_operand.vmem [shape: f32[1,16], index: 1, kind: input, shape index: {}]
  %s2 = inlined_call_operand.hbm [shape: f32[2,8,32], index: 2, kind: output, shape index: {}]
  %s3 = sld [smem:[#allocation0]]
  $region41: #{tpu_custom_call.1} parent=0
    _
  %s5 = ssub.s32 1, %s3
  %s6 = scalar_select 0, %s5, %s3
  $region1: #{tpu_custom_call.1} parent=0
    #allocation2 [shape = 'u8[8192]{0}', space=vmem, size = 0x2000, scoped, tag = 'output window, operand 0']
    #allocation3 [shape = 's32[2]{0}', space=sflag, size = 0x8, scoped, tag = 'scoped memory for tpu_custom_call.1']
    %7 = vsyncpa [#allocation3], 0
    %s8 = scalar_lea.sflag [#allocation3], 1
    %9 = vsyncpa %s8, 0
    loop: start=0, step=1, limit=4
    $region2: #{tpu_custom_call.1} parent=1 // loop_pre_header
      _
    $region3: #{tpu_custom_call.1} parent=1 // loop_header
      %s11 = sphi 0, %s15
      %p12 = scmp.ge.s32.totalorder %s11, 4
      %s18 = sphi 0, %s30
      %s19 = sphi 0, %s26
      %s20 = sphi 0, %s18
      %s21 = sphi 0, %s19
      %s22 = sphi 0, %s20
      %s23 = sphi 0, %s21
      %s35 = sphi 0, %s37
      %s38 = sphi 0, %s35
      %s39 = sphi 0, %s38
      %s55 = sphi 0, %s39
      %s59 = sphi 0, %s59
      %s61 = sphi 0, %s59
      %s62 = sphi 0, %s61
      %s76 = sphi 0, %s62
      %s84 = sphi 0, %s86
      %s87 = sphi 0, %s84
      %s88 = sphi 0, %s87
      %s104 = sphi 0, %s88
    $region4: #{tpu_custom_call.1} parent=1 // loop_header_branch
      %14 = sbr.rel (%p12) target = $region8
    $region5: #{tpu_custom_call.1} parent=1 // loop_body
      %s16 = ssub.s32 %s11, 1
      %s17 = ssub.s32 %s11, 2
      %s24 = sadd.s32 1, %s19
      %p25 = scmp.ge.s32.totalorder %s24, 1
      %s26 = scalar_select %p25, 0, %s24
      %s27 = sadd.s32 1, %s18
      %s28 = scalar_select %p25, %s27, %s18
      %p29 = scmp.ge.s32.totalorder %s28, 2
      %s30 = scalar_select %p29, 0, %s28
      %s31 = ssub.s32 %s18, %s30
      %s32 = ssub.s32 %s19, %s26
      %s33 = sor.u32 %s31, %s32
      %p34 = scmp.eq.s32.totalorder %s33, 0
      %s36 = sadd.s32 %s35, 1
      %s37 = scalar_select %p34, %s35, %s36
      %p40 = pneg %p34
      %p41 = scmp.eq.s32.totalorder %s11, 1
      %p42 = por %p40, %p41
      %p43 = scmp.ne.s32.totalorder %s35, %s38
      %p44 = scmp.eq.s32.totalorder %s11, 0
      %p45 = por %p43, %p44
      %p46 = scmp.ne.s32.totalorder %s35, %s38
      %p47 = scmp.eq.s32.totalorder %s16, 1
      %p48 = por %p46, %p47
      %p49 = scmp.ne.s32.totalorder %s38, %s39
      %p50 = scmp.eq.s32.totalorder %s16, 0
      %p51 = por %p49, %p50
      %p52 = scmp.ne.s32.totalorder %s38, %s39
      %p53 = scmp.eq.s32.totalorder %s17, 1
      %p54 = por %p52, %p53
      %p56 = scmp.ne.s32.totalorder %s39, %s55
      %p57 = scmp.eq.s32.totalorder %s17, 0
      %p58 = por %p56, %p57
      %s60 = sadd.s32 %s59, 1
      %p63 = scmp.eq.s32.totalorder %s11, 1
      %p64 = scmp.ne.s32.totalorder %s59, %s61
      %p65 = scmp.eq.s32.totalorder %s11, 0
      %p66 = por %p64, %p65
      %p67 = scmp.ne.s32.totalorder %s59, %s61
      %p68 = scmp.eq.s32.totalorder %s16, 1
      %p69 = por %p67, %p68
      %p70 = scmp.ne.s32.totalorder %s61, %s62
      %p71 = scmp.eq.s32.totalorder %s16, 0
      %p72 = por %p70, %p71
      %p73 = scmp.ne.s32.totalorder %s61, %s62
      %p74 = scmp.eq.s32.totalorder %s17, 1
      %p75 = por %p73, %p74
      %p77 = scmp.ne.s32.totalorder %s62, %s76
      %p78 = scmp.eq.s32.totalorder %s17, 0
      %p79 = por %p77, %p78
      %s80 = ssub.s32 %s18, %s30
      %s81 = ssub.s32 %s19, %s26
      %s82 = sor.u32 %s80, %s81
      %p83 = scmp.eq.s32.totalorder %s82, 0
      %s85 = sadd.s32 %s84, 1
      %s86 = scalar_select %p83, %s84, %s85
      %p89 = pneg %p83
      %p90 = scmp.eq.s32.totalorder %s11, 1
      %p91 = por %p89, %p90
      %p92 = scmp.ne.s32.totalorder %s84, %s87
      %p93 = scmp.eq.s32.totalorder %s11, 0
      %p94 = por %p92, %p93
      %p95 = scmp.ne.s32.totalorder %s84, %s87
      %p96 = scmp.eq.s32.totalorder %s16, 1
      %p97 = por %p95, %p96
      %p98 = scmp.ne.s32.totalorder %s87, %s88
      %p99 = scmp.eq.s32.totalorder %s16, 0
      %p100 = por %p98, %p99
      %p101 = scmp.ne.s32.totalorder %s87, %s88
      %p102 = scmp.eq.s32.totalorder %s17, 1
      %p103 = por %p101, %p102
      %p105 = scmp.ne.s32.totalorder %s88, %s104
      %p106 = scmp.eq.s32.totalorder %s17, 0
      %p107 = por %p105, %p106
      %p108 = scmp.le.s32.totalorder 1, %s11
      %p109 = scmp.lt.s32.totalorder %s11, 3
      %p110 = pnand %p108, %p109
      %p111 = pneg %p110
      // Predicated region
      $region9: #{tpu_custom_call.1} parent=5 // pred_check
        _
      $region10: #{tpu_custom_call.1} parent=5 // pred_check_branch
        %113 = sbr.rel (%p110) target = $region12
      $region11: #{tpu_custom_call.1} parent=5 // pred_region
        %s114 = ssub.s32 %s11, 1
        // Predicated region
        $region13: #{tpu_custom_call.1} parent=11 // pred_check
          %p115 = pneg %p72
        $region14: #{tpu_custom_call.1} parent=11 // pred_check_branch
          %117 = sbr.rel (%p115) target = $region16
        $region15: #{tpu_custom_call.1} parent=11 // pred_region
          _
        $region16: #{tpu_custom_call.1} parent=11 // pred_fallthru
          _
      $region12: #{tpu_custom_call.1} parent=5 // pred_fallthru
        _
      %p118 = scmp.lt.s32.totalorder %s11, 2
      // Predicated region
      $region17: #{tpu_custom_call.1} parent=5 // pred_check
        %p119 = pneg %p118
      $region18: #{tpu_custom_call.1} parent=5 // pred_check_branch
        %121 = sbr.rel (%p119) target = $region20
      $region19: #{tpu_custom_call.1} parent=5 // pred_region
        // Predicated region
        $region21: #{tpu_custom_call.1} parent=19 // pred_check
          %p122 = pneg %p45
        $region22: #{tpu_custom_call.1} parent=19 // pred_check_branch
          %124 = sbr.rel (%p122) target = $region24
        $region23: #{tpu_custom_call.1} parent=19 // pred_region
          %p125 = scmp.lt.s32.totalorder %s18, 1
          %s126 = scalar_select %p125, %s18, 1
          %p127 = scmp.lt.s32.totalorder %s19, 0
          %s128 = scalar_select %p127, %s19, 0
          %s129 = sadd.s32 %s128, %s126
          %s130 = smul.addr %s129, 8
          %s131 = scalar_lea.vmem %s0, %s130
        $region24: #{tpu_custom_call.1} parent=19 // pred_fallthru
          _
      $region20: #{tpu_custom_call.1} parent=5 // pred_fallthru
        _
      %p132 = scmp.le.s32.totalorder 1, %s11
      %p133 = scmp.lt.s32.totalorder %s11, 3
      %p134 = pnand %p132, %p133
      %p135 = pneg %p134
      // Predicated region
      $region25: #{tpu_custom_call.1} parent=5 // pred_check
        _
      $region26: #{tpu_custom_call.1} parent=5 // pred_check_branch
        %137 = sbr.rel (%p134) target = $region28
      $region27: #{tpu_custom_call.1} parent=5 // pred_region
        %s138 = ssub.s32 %s11, 1
        %p139 = scmp.lt.s32.totalorder %s20, 1
        %s140 = scalar_select %p139, %s20, 1
        %p141 = scmp.lt.s32.totalorder %s21, 0
        %s142 = scalar_select %p141, %s21, 0
        %s143 = sadd.s32 %s142, %s140
        %s144 = smul.addr %s143, 8
        %s145 = scalar_lea.vmem %s0, %s144
        %p146 = pneg %p51
        %p147 = pneg %p48
        %p148 = pneg %p72
        %p149 = pneg %p69
        %p150 = pneg %p100
        %p151 = pneg %p97
        %s152 = sand.u32 %s87, 1
        %s153 = scalar_lea.sflag [#allocation3], %s152
        %s154 = sand.u32 %s87, 1
        %s155 = smul.addr %s154, 8
        %s156 = scalar_lea.vmem [#allocation2], %s155
        %p157 = scmp.lt.s32.totalorder %s20, 1
        %s158 = scalar_select %p157, %s20, 1
        %p159 = scmp.lt.s32.totalorder %s21, 0
        %s160 = scalar_select %p159, %s21, 0
        %s161 = sadd.s32 %s160, %s158
        %s162 = smul.addr %s161, 8
        %s163 = scalar_lea.vmem %s0, %s162
        %v164 = vld [vmem:[%s163] sm:$0xff]
        %v165 = vcvt.s32.f32 %v164
        %v166 = vld [vmem:[%s1] sm:$0x1]
        %168 = vset.pattern.permute.xlu0 0
        %169 = vperm.xlu0 %168, %v165
        %v170 = vpop.permute.xlu0 %169
        %v173 = vperm.slane %v166, 0
        %v175 = vmul.f32 %v170, %v173
        %v176 = vand.u32 2147483647, %v175
        %vm177 = vcmp.le.f32.partialorder %v176, 0.7853982
        %vm178 = vcmp.lt.s32.totalorder %v175, 0
        %v179 = vand.u32 %v175, 2139095040
        %v180 = vshrl.u32 %v179, 23
        %v181 = vsub.s32 %v180, 127
        %v182 = vand.u32 2147483647, %v175
        %v183 = vand.u32 %v182, 8388607
        %v184 = vor.u32 %v183, 8388608
        %v185 = vsub.s32 0, %v184
        %v186 = vadd.s32 %v181, 1
        %vm187 = vcmp.gt.s32.totalorder %v186, 0
        %v188 = vsel %vm187, %v186, 0
        %v189 = vshrl.u32 %v188, 5
        %v190 = vand.u32 %v188, 31
        %v191 = vsub.s32 32, %v190
        %v192 = vshrl.u32 683565275, %v191
        %v193 = vshll.u32 683565275, %v190
        %v194 = vshrl.u32 2475754826, %v191
        %v195 = vor.u32 %v193, %v194
        %v196 = vshll.u32 2475754826, %v190
        %v197 = vshrl.u32 2131351028, %v191
        %v198 = vor.u32 %v196, %v197
        %v199 = vshll.u32 2131351028, %v190
        %v200 = vshrl.u32 2102212464, %v191
        %v201 = vor.u32 %v199, %v200
        %v202 = vshll.u32 2102212464, %v190
        %v203 = vshrl.u32 920167782, %v191
        %v204 = vor.u32 %v202, %v203
        %v205 = vshll.u32 920167782, %v190
        %v206 = vshrl.u32 1326507024, %v191
        %v207 = vor.u32 %v205, %v206
        %vm208 = vcmp.lt.s32.totalorder %v189, 1
        %vm209 = vcmp.lt.s32.totalorder %v189, 2
        %vm210 = vcmp.lt.s32.totalorder %v189, 3
        %vm211 = vcmp.lt.s32.totalorder %v189, 4
        %v212 = vsel %vm208, %v192, %v195
        %v213 = vsel %vm211, %v201, 2102212464
        %v214 = vsel %vm210, %v198, %v213
        %v215 = vsel %vm209, %v212, %v214
        %v216 = vsel %vm208, %v195, %v198
        %v217 = vsel %vm211, %v204, 920167782
        %v218 = vsel %vm210, %v201, %v217
        %v219 = vsel %vm209, %v216, %v218
        %v220 = vsel %vm208, %v198, %v201
        %v221 = vsel %vm211, %v207, 1326507024
        %v222 = vsel %vm210, %v204, %v221
        %v223 = vsel %vm209, %v220, %v222
        %v224 = vshll.u32 %v184, 8
        %v225 = vand.u32 %v224, 65535
        %v226 = vshrl.u32 %v224, 16
        %v227 = vand.u32 %v223, 65535
        %v228 = vshrl.u32 %v223, 16
        %v229 = vmul.u32 %v225, %v227
        %v230 = vmul.u32 %v225, %v228
        %v231 = vmul.u32 %v226, %v227
        %v232 = vmul.u32 %v226, %v228
        %v233 = vshll.u32 %v230, 16
        %v234 = vshrl.u32 %v230, 16
        %v235 = vshll.u32 %v231, 16
        %v236 = vshrl.u32 %v231, 16
        %vm237 = vc.u32 %v229, %v233
        %v238 = vsel %vm237, 1, 0
        %v239 = vadd.s32 %v229, %v233
        %v240 = vadd.s32 %v232, %v238
        %vm241 = vc.u32 %v239, %v235
        %v242 = vsel %vm241, 1, 0
        %v243 = vadd.s32 %v239, %v235
        %v244 = vadd.s32 %v240, %v242
        %v245 = vadd.s32 %v244, %v234
        %v246 = vadd.s32 %v245, %v236
        %v247 = vand.u32 %v224, 65535
        %v248 = vshrl.u32 %v224, 16
        %v249 = vand.u32 %v219, 65535
        %v250 = vshrl.u32 %v219, 16
        %v251 = vmul.u32 %v247, %v249
        %v252 = vmul.u32 %v247, %v250
        %v253 = vmul.u32 %v248, %v249
        %v254 = vmul.u32 %v248, %v250
        %v255 = vshll.u32 %v252, 16
        %v256 = vshrl.u32 %v252, 16
        %v257 = vshll.u32 %v253, 16
        %v258 = vshrl.u32 %v253, 16
        %vm259 = vc.u32 %v251, %v255
        %v260 = vsel %vm259, 1, 0
        %v261 = vadd.s32 %v251, %v255
        %v262 = vadd.s32 %v254, %v260
        %vm263 = vc.u32 %v261, %v257
        %v264 = vsel %vm263, 1, 0
        %v265 = vadd.s32 %v261, %v257
        %v266 = vadd.s32 %v262, %v264
        %v267 = vadd.s32 %v266, %v256
        %v268 = vadd.s32 %v267, %v258
        %v269 = vmul.u32 %v224, %v215
        %v270 = vadd.s32 %v246, %v265
        %vm271 = vc.u32 %v246, %v265
        %v272 = vadd.s32 %v268, 1
        %v273 = vsel %vm271, %v272, %v268
        %v274 = vadd.s32 %v269, %v273
        %v275 = vadd.s32 %v274, 536870912
        %v276 = vshrl.u32 %v275, 30
        %v277 = vshll.u32 %v276, 30
        %v278 = vsub.s32 %v274, %v277
        %vm279 = vcmp.lt.s32.totalorder %v278, 0
        %v280 = vsub.s32 0, %v278
        %v281 = vsel %vm279, %v280, %v278
        %v282 = vclz %v281
        %v283 = vsub.s32 %v282, 2
        %vm284 = vcmp.gt.s32.totalorder 0, %v283
        %v285 = vsel %vm284, 0, %v283
        %v286 = vsub.s32 32, %v285
        %v287 = vshll.u32 %v278, %v285
        %v288 = vshrl.u32 %v270, %v286
        %v289 = vor.u32 %v287, %v288
        %v290 = vsub.s32 4294967266, %v285
        %v291 = vadd.s32 %v290, 127
        %v292 = vshll.u32 %v291, 23
        %v293 = vor.u32 4788187, %v292
        %v294 = vand.u32 2147483647, %v293
        %v296 = vcvt.s32.f32 %v289
        %v297 = vmul.f32 %v296, %v294
        %v298 = vxor.u32 %v297, 2147483648
        %v299 = vsel %vm178, %v298, %v297
        %v300 = vsub.s32 4, %v276
        %v301 = vsel %vm178, %v300, %v276
        %v302 = vsel %vm177, %v175, %v299
        %v303 = vsel %vm177, 0, %v301
        %v304 = vmul.f32 %v302, %v302
        %v305 = vmul.f32 %v304, -0.001358992
        %v306 = vadd.f32 %v305, 0.041655596
        %v307 = vmul.f32 %v304, %v306
        %v308 = vadd.f32 %v307, -0.4999988
        %v309 = vmul.f32 %v304, %v308
        %v310 = vadd.f32 1.0, %v309
        %v311 = vmul.f32 %v302, %v302
        %v312 = vmul.f32 %v311, -0.00019511016
        %v313 = vadd.f32 %v312, 0.008332121
        %v314 = vmul.f32 %v311, %v313
        %v315 = vadd.f32 %v314, -0.16666654
        %v316 = vmul.f32 %v311, %v315
        %v317 = vadd.f32 %v316, 1.0
        %v318 = vmul.f32 %v317, %v302
        %vm319 = vweird.f32 %v175
        %v320 = vadd.s32 %v303, 3
        %v321 = vand.u32 %v320, 3
        %vm322 = vcmp.lt.s32.totalorder %v321, 2
        %vm323 = vcmp.eq.s32.totalorder %v321, 0
        %v324 = vxor.u32 %v318, 2147483648
        %v325 = vsel %vm323, %v310, %v324
        %vm326 = vcmp.eq.s32.totalorder %v321, 2
        %v327 = vxor.u32 %v310, 2147483648
        %v328 = vsel %vm326, %v327, %v318
        %v329 = vsel %vm322, %v325, %v328
        %v330 = vsel %vm319, nan, %v329
        %v331 = vand.u32 2147483647, %v175
        %vm332 = vcmp.le.f32.partialorder %v331, 0.7853982
        %vm333 = vcmp.lt.s32.totalorder %v175, 0
        %v334 = vand.u32 %v175, 2139095040
        %v335 = vshrl.u32 %v334, 23
        %v336 = vsub.s32 %v335, 127
        %v337 = vand.u32 2147483647, %v175
        %v338 = vand.u32 %v337, 8388607
        %v339 = vor.u32 %v338, 8388608
        %v340 = vsub.s32 0, %v339
        %v341 = vadd.s32 %v336, 1
        %vm342 = vcmp.gt.s32.totalorder %v341, 0
        %v343 = vsel %vm342, %v341, 0
        %v344 = vshrl.u32 %v343, 5
        %v345 = vand.u32 %v343, 31
        %v346 = vsub.s32 32, %v345
        %v347 = vshrl.u32 683565275, %v346
        %v348 = vshll.u32 683565275, %v345
        %v349 = vshrl.u32 2475754826, %v346
        %v350 = vor.u32 %v348, %v349
        %v351 = vshll.u32 2475754826, %v345
        %v352 = vshrl.u32 2131351028, %v346
        %v353 = vor.u32 %v351, %v352
        %v354 = vshll.u32 2131351028, %v345
        %v355 = vshrl.u32 2102212464, %v346
        %v356 = vor.u32 %v354, %v355
        %v357 = vshll.u32 2102212464, %v345
        %v358 = vshrl.u32 920167782, %v346
        %v359 = vor.u32 %v357, %v358
        %v360 = vshll.u32 920167782, %v345
        %v361 = vshrl.u32 1326507024, %v346
        %v362 = vor.u32 %v360, %v361
        %vm363 = vcmp.lt.s32.totalorder %v344, 1
        %vm364 = vcmp.lt.s32.totalorder %v344, 2
        %vm365 = vcmp.lt.s32.totalorder %v344, 3
        %vm366 = vcmp.lt.s32.totalorder %v344, 4
        %v367 = vsel %vm363, %v347, %v350
        %v368 = vsel %vm366, %v356, 2102212464
        %v369 = vsel %vm365, %v353, %v368
        %v370 = vsel %vm364, %v367, %v369
        %v371 = vsel %vm363, %v350, %v353
        %v372 = vsel %vm366, %v359, 920167782
        %v373 = vsel %vm365, %v356, %v372
        %v374 = vsel %vm364, %v371, %v373
        %v375 = vsel %vm363, %v353, %v356
        %v376 = vsel %vm366, %v362, 1326507024
        %v377 = vsel %vm365, %v359, %v376
        %v378 = vsel %vm364, %v375, %v377
        %v379 = vshll.u32 %v339, 8
        %v380 = vand.u32 %v379, 65535
        %v381 = vshrl.u32 %v379, 16
        %v382 = vand.u32 %v378, 65535
        %v383 = vshrl.u32 %v378, 16
        %v384 = vmul.u32 %v380, %v382
        %v385 = vmul.u32 %v380, %v383
        %v386 = vmul.u32 %v381, %v382
        %v387 = vmul.u32 %v381, %v383
        %v388 = vshll.u32 %v385, 16
        %v389 = vshrl.u32 %v385, 16
        %v390 = vshll.u32 %v386, 16
        %v391 = vshrl.u32 %v386, 16
        %vm392 = vc.u32 %v384, %v388
        %v393 = vsel %vm392, 1, 0
        %v394 = vadd.s32 %v384, %v388
        %v395 = vadd.s32 %v387, %v393
        %vm396 = vc.u32 %v394, %v390
        %v397 = vsel %vm396, 1, 0
        %v398 = vadd.s32 %v394, %v390
        %v399 = vadd.s32 %v395, %v397
        %v400 = vadd.s32 %v399, %v389
        %v401 = vadd.s32 %v400, %v391
        %v402 = vand.u32 %v379, 65535
        %v403 = vshrl.u32 %v379, 16
        %v404 = vand.u32 %v374, 65535
        %v405 = vshrl.u32 %v374, 16
        %v406 = vmul.u32 %v402, %v404
        %v407 = vmul.u32 %v402, %v405
        %v408 = vmul.u32 %v403, %v404
        %v409 = vmul.u32 %v403, %v405
        %v410 = vshll.u32 %v407, 16
        %v411 = vshrl.u32 %v407, 16
        %v412 = vshll.u32 %v408, 16
        %v413 = vshrl.u32 %v408, 16
        %vm414 = vc.u32 %v406, %v410
        %v415 = vsel %vm414, 1, 0
        %v416 = vadd.s32 %v406, %v410
        %v417 = vadd.s32 %v409, %v415
        %vm418 = vc.u32 %v416, %v412
        %v419 = vsel %vm418, 1, 0
        %v420 = vadd.s32 %v416, %v412
        %v421 = vadd.s32 %v417, %v419
        %v422 = vadd.s32 %v421, %v411
        %v423 = vadd.s32 %v422, %v413
        %v424 = vmul.u32 %v379, %v370
        %v425 = vadd.s32 %v401, %v420
        %vm426 = vc.u32 %v401, %v420
        %v427 = vadd.s32 %v423, 1
        %v428 = vsel %vm426, %v427, %v423
        %v429 = vadd.s32 %v424, %v428
        %v430 = vadd.s32 %v429, 536870912
        %v431 = vshrl.u32 %v430, 30
        %v432 = vshll.u32 %v431, 30
        %v433 = vsub.s32 %v429, %v432
        %vm434 = vcmp.lt.s32.totalorder %v433, 0
        %v435 = vsub.s32 0, %v433
        %v436 = vsel %vm434, %v435, %v433
        %v437 = vclz %v436
        %v438 = vsub.s32 %v437, 2
        %vm439 = vcmp.gt.s32.totalorder 0, %v438
        %v440 = vsel %vm439, 0, %v438
        %v441 = vsub.s32 32, %v440
        %v442 = vshll.u32 %v433, %v440
        %v443 = vshrl.u32 %v425, %v441
        %v444 = vor.u32 %v442, %v443
        %v445 = vsub.s32 4294967266, %v440
        %v446 = vadd.s32 %v445, 127
        %v447 = vshll.u32 %v446, 23
        %v448 = vor.u32 4788187, %v447
        %v449 = vand.u32 2147483647, %v448
        %v451 = vcvt.s32.f32 %v444
        %v452 = vmul.f32 %v451, %v449
        %v453 = vxor.u32 %v452, 2147483648
        %v454 = vsel %vm333, %v453, %v452
        %v455 = vsub.s32 4, %v431
        %v456 = vsel %vm333, %v455, %v431
        %v457 = vsel %vm332, %v175, %v454
        %v458 = vsel %vm332, 0, %v456
        %v459 = vmul.f32 %v457, %v457
        %v460 = vmul.f32 %v459, -0.001358992
        %v461 = vadd.f32 %v460, 0.041655596
        %v462 = vmul.f32 %v459, %v461
        %v463 = vadd.f32 %v462, -0.4999988
        %v464 = vmul.f32 %v459, %v463
        %v465 = vadd.f32 1.0, %v464
        %v466 = vmul.f32 %v457, %v457
        %v467 = vmul.f32 %v466, -0.00019511016
        %v468 = vadd.f32 %v467, 0.008332121
        %v469 = vmul.f32 %v466, %v468
        %v470 = vadd.f32 %v469, -0.16666654
        %v471 = vmul.f32 %v466, %v470
        %v472 = vadd.f32 %v471, 1.0
        %v473 = vmul.f32 %v472, %v457
        %vm474 = vweird.f32 %v175
        %v475 = vand.u32 %v458, 3
        %vm476 = vcmp.lt.s32.totalorder %v475, 2
        %vm477 = vcmp.eq.s32.totalorder %v475, 0
        %v478 = vxor.u32 %v473, 2147483648
        %v479 = vsel %vm477, %v465, %v478
        %vm480 = vcmp.eq.s32.totalorder %v475, 2
        %v481 = vxor.u32 %v465, 2147483648
        %v482 = vsel %vm480, %v481, %v473
        %v483 = vsel %vm476, %v479, %v482
        %v484 = vsel %vm474, nan, %v483
        %486 = vrot.lane.b32.xlu0 %v484, 16
        %v487 = vpop.permute.xlu0 %486
        %vm489 = vcmask 130048
        %v490 = vsel %vm489, %v330, %v487
        %vm491 = vcmp.ne.s32.totalorder %v164, 1
        %v492 = vsel %vm491, 1, 0
        %493 = vset.pattern.permute.xlu0 0
        %494 = vperm.xlu0 %493, %v492
        %v495 = vpop.permute.xlu0 %494
        %vm496 = vcmp.eq.s32.totalorder %v495, 1
        %v497 = vsel %vm496, %v490, 0.0
        %vm498 = vcmask 261120
        %499 = vst.msk [vmem:[%s156] sm:$0xff] %vm498, %v497
        %s500 = sand.u32 %s87, 1
        %s501 = scalar_lea.sflag [#allocation3], %s500
        %s502 = sand.u32 %s87, 1
        %s503 = smul.addr %s502, 8
        %s504 = scalar_lea.vmem [#allocation2], %s503
        // Predicated region
        $region29: #{tpu_custom_call.1} parent=27 // pred_check
          %p505 = pneg %p97
        $region30: #{tpu_custom_call.1} parent=27 // pred_check_branch
          %507 = sbr.rel (%p505) target = $region32
        $region31: #{tpu_custom_call.1} parent=27 // pred_region
          %509 = vsyncadd %s501, 0
          %s510 = sadd.s32 %s21, %s20
          %s511 = smul.addr %s510, 8
          %s512 = scalar_lea.hbm %s2, %s511
          %s514 = sshll.u32 %s504, 4
          %s515 = int_to_ptr.vmem [resolvable:$true] %s514
          %s516 = sshll.u32 %s512, 4
          %s517 = int_to_ptr.hbm [resolvable:$true] %s516
          %519 = dma.vmem_to_hbm [thread:$0]  %s515, 128, %s517, %s501
        $region32: #{tpu_custom_call.1} parent=27 // pred_fallthru
          _
      $region28: #{tpu_custom_call.1} parent=5 // pred_fallthru
        _
      %p520 = scmp.le.s32.totalorder 2, %s11
      // Predicated region
      $region33: #{tpu_custom_call.1} parent=5 // pred_check
        %p521 = pneg %p520
      $region34: #{tpu_custom_call.1} parent=5 // pred_check_branch
        %523 = sbr.rel (%p521) target = $region36
      $region35: #{tpu_custom_call.1} parent=5 // pred_region
        %s524 = ssub.s32 %s11, 2
        // Predicated region
        $region37: #{tpu_custom_call.1} parent=35 // pred_check
          %p525 = pneg %p103
        $region38: #{tpu_custom_call.1} parent=35 // pred_check_branch
          %527 = sbr.rel (%p525) target = $region40
        $region39: #{tpu_custom_call.1} parent=35 // pred_region
          %s528 = sand.u32 %s88, 1
          %s529 = scalar_lea.sflag [#allocation3], %s528
          %s530 = sand.u32 %s88, 1
          %s531 = smul.addr %s530, 8
          %s532 = scalar_lea.vmem [#allocation2], %s531
          %534 = dma.done %s529, 128
        $region40: #{tpu_custom_call.1} parent=35 // pred_fallthru
          _
      $region36: #{tpu_custom_call.1} parent=5 // pred_fallthru
        _
    $region6: #{tpu_custom_call.1} parent=1 // loop_footer
      %s15 = sadd.s32 1, %s11
    $region7: #{tpu_custom_call.1} parent=1 // loop_footer_branch
      %10 = sbr.rel target = $region3
    $region8: #{tpu_custom_call.1} parent=1 // loop_exit
      _
    %535 = vsyncpa [#allocation3], 1
    %s536 = scalar_lea.sflag [#allocation3], 1
    %537 = vsyncpa %s536, 1

</llo_original>
